<compile_context>
chip_gen: v7x
topology: tpu7x:2x2x1
jax: 0.10.0
libtpu: 0.0.40
codegen_flags: <defaults>
</compile_context>

<pallas_src>
import functools

import jax
import jax.numpy as jnp
from jax.experimental import pallas as pl
from jax.experimental.pallas import tpu as pltpu


def _round_up(x, m):
    return (x + m - 1) // m * m


def _mlp_fused_kernel(*refs, num_layers, eps):
    """Fused forward for all layers.

    refs = (x_ref, w_0, p_0, w_1, p_1, ..., w_{L-1}, p_{L-1}, o_ref)
    p_l is a stacked (3, out_f) slab: row 0 = bias, row 1 = LN gamma, row 2 = LN beta.
    Hidden layers apply ReLU after LayerNorm; the output layer is identity.
    Intermediate activations never leave on-chip registers/VMEM.
    """
    x_ref = refs[0]
    o_ref = refs[1 + 2 * num_layers]

    y = x_ref[...]
    for li in range(num_layers):
        w = refs[1 + 2 * li][...]
        p = refs[2 + 2 * li][...]
        bias = p[0:1, :]
        gamma = p[1:2, :]
        beta = p[2:3, :]

        # Linear on the MXU, f32 accumulation.
        y = jnp.dot(y, w, preferred_element_type=jnp.float32) + bias

        # LayerNorm over the feature (last) axis. NOTE: the feature axis is never
        # tiled — the mean/var reduction must span the full feature width.
        mean = jnp.mean(y, axis=-1, keepdims=True)
        centered = y - mean
        var = jnp.mean(centered * centered, axis=-1, keepdims=True)
        y = centered * jax.lax.rsqrt(var + eps)
        y = y * gamma + beta

        if li < num_layers - 1:  # hidden layers: ReLU; output layer: identity
            y = jnp.maximum(y, 0.0)

    o_ref[...] = y.astype(o_ref.dtype)


def mlp_forward(x, params, *, eps=1e-5, tile_n=None):
    """Fused MLP forward via one pallas_call, batch-tiled.

    x: (N, input_features) f32.  params: list of (W, b, gamma, beta) per layer,
    W shape (in_f, out_f).
    """
    n, in_f = x.shape
    num_layers = len(params)
    out_f = params[-1][0].shape[1]

    # Batch tiling: only the batch axis is tiled; weights use a constant index_map
    # so they stay VMEM-resident across all grid steps.
    if tile_n is None:
        tile_n = min(256, _round_up(n, 8))
    n_pad = _round_up(n, tile_n)
    if n_pad != n:
        x = jnp.pad(x, ((0, n_pad - n), (0, 0)))

    flat_inputs = [x]
    in_specs = [pl.BlockSpec((tile_n, in_f), lambda i: (i, 0))]
    flops = 0
    bytes_accessed = x.size * 4 + n_pad * out_f * 4
    for (w, b, g, be) in params:
        kin, kout = w.shape
        # Pack (bias, gamma, beta) into one (3, out_f) slab -> single DMA per layer.
        p = jnp.stack([b, g, be], axis=0)
        flat_inputs += [w, p]
        in_specs += [
            pl.BlockSpec((kin, kout), lambda i: (0, 0)),
            pl.BlockSpec((3, kout), lambda i: (0, 0)),
        ]
        flops += 2 * n_pad * kin * kout
        bytes_accessed += (w.size + p.size) * 4

    kernel = functools.partial(_mlp_fused_kernel, num_layers=num_layers, eps=eps)

    out = pl.pallas_call(
        kernel,
        out_shape=jax.ShapeDtypeStruct((n_pad, out_f), jnp.float32),
        grid=(n_pad // tile_n,),
        in_specs=in_specs,
        out_specs=pl.BlockSpec((tile_n, out_f), lambda i: (i, 0)),
        compiler_params=pltpu.CompilerParams(
            dimension_semantics=("parallel",),  # batch axis: shard across TCs on v7x
        ),
        cost_estimate=pl.CostEstimate(
            flops=flops,
            transcendentals=n_pad * num_layers,  # one rsqrt per row per layer
            bytes_accessed=bytes_accessed,
        ),
    )(*flat_inputs)
    return out[:n]


def init_mlp_params(key, input_features, hidden_features, output_features):
    """Deterministic init mimicking PyTorch defaults (uniform +-1/sqrt(fan_in))."""
    params = []
    in_f = input_features
    dims = list(hidden_features) + [output_features]
    for out_f in dims:
        key, kw, kb = jax.random.split(key, 3)
        bound = 1.0 / jnp.sqrt(jnp.float32(in_f))
        w = jax.random.uniform(kw, (in_f, out_f), jnp.float32, -bound, bound)
        b = jax.random.uniform(kb, (out_f,), jnp.float32, -bound, bound)
        gamma = jnp.ones((out_f,), jnp.float32)   # LayerNorm weight
        beta = jnp.zeros((out_f,), jnp.float32)   # LayerNorm bias
        params.append((w, b, gamma, beta))
        in_f = out_f
    return params


def mlp_reference(x, params):
    """Pure-JAX reference (matches the PyTorch module semantics)."""
    n_layers = len(params)
    for li, (w, b, gamma, beta) in enumerate(params):
        y = x @ w + b
        mean = jnp.mean(y, axis=-1, keepdims=True)
        var = jnp.mean((y - mean) ** 2, axis=-1, keepdims=True)
        y = (y - mean) * jax.lax.rsqrt(var + 1e-5)
        y = y * gamma + beta
        if li < n_layers - 1:
            y = jnp.maximum(y, 0.0)
        x = y
    return x


if __name__ == "__main__":
    key = jax.random.PRNGKey(0)
    key, kx = jax.random.split(key)

    batch = 8
    input_features = 16
    hidden_features = [32, 32]
    output_features = 8

    x = jax.random.normal(kx, (batch, input_features), jnp.float32)
    params = init_mlp_params(key, input_features, hidden_features, output_features)

    out = mlp_forward(x, params)
    out = jax.block_until_ready(out)

    ref = mlp_reference(x, params)
    assert out.shape == (batch, output_features)
    assert jnp.allclose(out, ref, atol=1e-4, rtol=1e-4), "mismatch vs reference"

    print("KERNEL_OK")
</pallas_src>

<mosaic_0001>
module attributes {stable_mosaic.version = 11 : i64} {
  func.func @_mlp_fused_kernel(%arg0: i32, %arg1: memref<8x16xf32, #tpu.memory_space<vmem>>, %arg2: memref<16x32xf32, #tpu.memory_space<vmem>>, %arg3: memref<3x32xf32, #tpu.memory_space<vmem>>, %arg4: memref<32x32xf32, #tpu.memory_space<vmem>>, %arg5: memref<3x32xf32, #tpu.memory_space<vmem>>, %arg6: memref<32x8xf32, #tpu.memory_space<vmem>>, %arg7: memref<3x8xf32, #tpu.memory_space<vmem>>, %arg8: memref<8x8xf32, #tpu.memory_space<vmem>>) attributes {dimension_semantics = [#tpu.dimension_semantics<parallel>], iteration_bounds = array<i64: 1>, scalar_prefetch = 0 : i64, scratch_operands = 0 : i64, tpu.core_type = #tpu.core_type<tc>, window_params = [{transform_indices = @transform_0, window_bounds = array<i64: 8, 16>}, {pipeline_mode = #tpu.pipeline_mode<synchronous>, transform_indices = @transform_1, window_bounds = array<i64: 16, 32>}, {pipeline_mode = #tpu.pipeline_mode<synchronous>, transform_indices = @transform_2, window_bounds = array<i64: 3, 32>}, {pipeline_mode = #tpu.pipeline_mode<synchronous>, transform_indices = @transform_3, window_bounds = array<i64: 32, 32>}, {pipeline_mode = #tpu.pipeline_mode<synchronous>, transform_indices = @transform_4, window_bounds = array<i64: 3, 32>}, {pipeline_mode = #tpu.pipeline_mode<synchronous>, transform_indices = @transform_5, window_bounds = array<i64: 32, 8>}, {pipeline_mode = #tpu.pipeline_mode<synchronous>, transform_indices = @transform_6, window_bounds = array<i64: 3, 8>}, {transform_indices = @transform_7, window_bounds = array<i64: 8, 8>}]} {
    %c0 = arith.constant 0 : index
    %c0_0 = arith.constant 0 : index
    %0 = vector.load %arg1[%c0, %c0_0] : memref<8x16xf32, #tpu.memory_space<vmem>>, vector<8x16xf32>
    %c0_1 = arith.constant 0 : index
    %c0_2 = arith.constant 0 : index
    %1 = vector.load %arg2[%c0_1, %c0_2] : memref<16x32xf32, #tpu.memory_space<vmem>>, vector<16x32xf32>
    %c0_3 = arith.constant 0 : index
    %c0_4 = arith.constant 0 : index
    %2 = vector.load %arg3[%c0_3, %c0_4] : memref<3x32xf32, #tpu.memory_space<vmem>>, vector<3x32xf32>
    %3 = vector.extract_strided_slice %2 {offsets = [0, 0], sizes = [1, 32], strides = [1, 1]} : vector<3x32xf32> to vector<1x32xf32>
    %4 = vector.extract_strided_slice %2 {offsets = [1, 0], sizes = [1, 32], strides = [1, 1]} : vector<3x32xf32> to vector<1x32xf32>
    %5 = vector.extract_strided_slice %2 {offsets = [2, 0], sizes = [1, 32], strides = [1, 1]} : vector<3x32xf32> to vector<1x32xf32>
    %cst = arith.constant dense<0.000000e+00> : vector<8x32xf32>
    %6 = tpu.matmul %0, %1, %cst {dimension_numbers = #tpu.dot_dimension_numbers<[1], [0], [0], [1], [0, 0, 1, 1], [], []>} : vector<8x16xf32>, vector<16x32xf32>, vector<8x32xf32> -> vector<8x32xf32>
    %7 = vector.broadcast %3 : vector<1x32xf32> to vector<8x32xf32>
    %8 = arith.addf %6, %7 : vector<8x32xf32>
    %cst_5 = arith.constant dense<0.000000e+00> : vector<8xf32>
    %9 = vector.multi_reduction <add>, %8, %cst_5 [1] : vector<8x32xf32> to vector<8xf32>
    %10 = vector.shape_cast %9 : vector<8xf32> to vector<8x1xf32>
    %cst_6 = arith.constant 3.200000e+01 : f32
    %11 = vector.broadcast %cst_6 : f32 to vector<8x1xf32>
    %12 = arith.divf %10, %11 : vector<8x1xf32>
    %13 = vector.broadcast %12 : vector<8x1xf32> to vector<8x32xf32>
    %14 = arith.subf %8, %13 : vector<8x32xf32>
    %15 = arith.mulf %14, %14 : vector<8x32xf32>
    %cst_7 = arith.constant dense<0.000000e+00> : vector<8xf32>
    %16 = vector.multi_reduction <add>, %15, %cst_7 [1] : vector<8x32xf32> to vector<8xf32>
    %17 = vector.shape_cast %16 : vector<8xf32> to vector<8x1xf32>
    %cst_8 = arith.constant 3.200000e+01 : f32
    %18 = vector.broadcast %cst_8 : f32 to vector<8x1xf32>
    %19 = arith.divf %17, %18 : vector<8x1xf32>
    %cst_9 = arith.constant 9.99999974E-6 : f32
    %20 = vector.broadcast %cst_9 : f32 to vector<8x1xf32>
    %21 = arith.addf %19, %20 : vector<8x1xf32>
    %22 = math.rsqrt %21 : vector<8x1xf32>
    %23 = vector.broadcast %22 : vector<8x1xf32> to vector<8x32xf32>
    %24 = arith.mulf %14, %23 : vector<8x32xf32>
    %25 = vector.broadcast %4 : vector<1x32xf32> to vector<8x32xf32>
    %26 = arith.mulf %24, %25 : vector<8x32xf32>
    %27 = vector.broadcast %5 : vector<1x32xf32> to vector<8x32xf32>
    %28 = arith.addf %26, %27 : vector<8x32xf32>
    %cst_10 = arith.constant 0.000000e+00 : f32
    %29 = vector.broadcast %cst_10 : f32 to vector<8x32xf32>
    %30 = arith.maximumf %28, %29 : vector<8x32xf32>
    %c0_11 = arith.constant 0 : index
    %c0_12 = arith.constant 0 : index
    %31 = vector.load %arg4[%c0_11, %c0_12] : memref<32x32xf32, #tpu.memory_space<vmem>>, vector<32x32xf32>
    %c0_13 = arith.constant 0 : index
    %c0_14 = arith.constant 0 : index
    %32 = vector.load %arg5[%c0_13, %c0_14] : memref<3x32xf32, #tpu.memory_space<vmem>>, vector<3x32xf32>
    %33 = vector.extract_strided_slice %32 {offsets = [0, 0], sizes = [1, 32], strides = [1, 1]} : vector<3x32xf32> to vector<1x32xf32>
    %34 = vector.extract_strided_slice %32 {offsets = [1, 0], sizes = [1, 32], strides = [1, 1]} : vector<3x32xf32> to vector<1x32xf32>
    %35 = vector.extract_strided_slice %32 {offsets = [2, 0], sizes = [1, 32], strides = [1, 1]} : vector<3x32xf32> to vector<1x32xf32>
    %cst_15 = arith.constant dense<0.000000e+00> : vector<8x32xf32>
    %36 = tpu.matmul %30, %31, %cst_15 {dimension_numbers = #tpu.dot_dimension_numbers<[1], [0], [0], [1], [0, 0, 1, 1], [], []>} : vector<8x32xf32>, vector<32x32xf32>, vector<8x32xf32> -> vector<8x32xf32>
    %37 = vector.broadcast %33 : vector<1x32xf32> to vector<8x32xf32>
    %38 = arith.addf %36, %37 : vector<8x32xf32>
    %cst_16 = arith.constant dense<0.000000e+00> : vector<8xf32>
    %39 = vector.multi_reduction <add>, %38, %cst_16 [1] : vector<8x32xf32> to vector<8xf32>
    %40 = vector.shape_cast %39 : vector<8xf32> to vector<8x1xf32>
    %cst_17 = arith.constant 3.200000e+01 : f32
    %41 = vector.broadcast %cst_17 : f32 to vector<8x1xf32>
    %42 = arith.divf %40, %41 : vector<8x1xf32>
    %43 = vector.broadcast %42 : vector<8x1xf32> to vector<8x32xf32>
    %44 = arith.subf %38, %43 : vector<8x32xf32>
    %45 = arith.mulf %44, %44 : vector<8x32xf32>
    %cst_18 = arith.constant dense<0.000000e+00> : vector<8xf32>
    %46 = vector.multi_reduction <add>, %45, %cst_18 [1] : vector<8x32xf32> to vector<8xf32>
    %47 = vector.shape_cast %46 : vector<8xf32> to vector<8x1xf32>
    %cst_19 = arith.constant 3.200000e+01 : f32
    %48 = vector.broadcast %cst_19 : f32 to vector<8x1xf32>
    %49 = arith.divf %47, %48 : vector<8x1xf32>
    %cst_20 = arith.constant 9.99999974E-6 : f32
    %50 = vector.broadcast %cst_20 : f32 to vector<8x1xf32>
    %51 = arith.addf %49, %50 : vector<8x1xf32>
    %52 = math.rsqrt %51 : vector<8x1xf32>
    %53 = vector.broadcast %52 : vector<8x1xf32> to vector<8x32xf32>
    %54 = arith.mulf %44, %53 : vector<8x32xf32>
    %55 = vector.broadcast %34 : vector<1x32xf32> to vector<8x32xf32>
    %56 = arith.mulf %54, %55 : vector<8x32xf32>
    %57 = vector.broadcast %35 : vector<1x32xf32> to vector<8x32xf32>
    %58 = arith.addf %56, %57 : vector<8x32xf32>
    %cst_21 = arith.constant 0.000000e+00 : f32
    %59 = vector.broadcast %cst_21 : f32 to vector<8x32xf32>
    %60 = arith.maximumf %58, %59 : vector<8x32xf32>
    %c0_22 = arith.constant 0 : index
    %c0_23 = arith.constant 0 : index
    %61 = vector.load %arg6[%c0_22, %c0_23] : memref<32x8xf32, #tpu.memory_space<vmem>>, vector<32x8xf32>
    %c0_24 = arith.constant 0 : index
    %c0_25 = arith.constant 0 : index
    %62 = vector.load %arg7[%c0_24, %c0_25] : memref<3x8xf32, #tpu.memory_space<vmem>>, vector<3x8xf32>
    %63 = vector.extract_strided_slice %62 {offsets = [0, 0], sizes = [1, 8], strides = [1, 1]} : vector<3x8xf32> to vector<1x8xf32>
    %64 = vector.extract_strided_slice %62 {offsets = [1, 0], sizes = [1, 8], strides = [1, 1]} : vector<3x8xf32> to vector<1x8xf32>
    %65 = vector.extract_strided_slice %62 {offsets = [2, 0], sizes = [1, 8], strides = [1, 1]} : vector<3x8xf32> to vector<1x8xf32>
    %cst_26 = arith.constant dense<0.000000e+00> : vector<8x8xf32>
    %66 = tpu.matmul %60, %61, %cst_26 {dimension_numbers = #tpu.dot_dimension_numbers<[1], [0], [0], [1], [0, 0, 1, 1], [], []>} : vector<8x32xf32>, vector<32x8xf32>, vector<8x8xf32> -> vector<8x8xf32>
    %67 = vector.broadcast %63 : vector<1x8xf32> to vector<8x8xf32>
    %68 = arith.addf %66, %67 : vector<8x8xf32>
    %cst_27 = arith.constant dense<0.000000e+00> : vector<8xf32>
    %69 = vector.multi_reduction <add>, %68, %cst_27 [1] : vector<8x8xf32> to vector<8xf32>
    %70 = vector.shape_cast %69 : vector<8xf32> to vector<8x1xf32>
    %cst_28 = arith.constant 8.000000e+00 : f32
    %71 = vector.broadcast %cst_28 : f32 to vector<8x1xf32>
    %72 = arith.divf %70, %71 : vector<8x1xf32>
    %73 = vector.broadcast %72 : vector<8x1xf32> to vector<8x8xf32>
    %74 = arith.subf %68, %73 : vector<8x8xf32>
    %75 = arith.mulf %74, %74 : vector<8x8xf32>
    %cst_29 = arith.constant dense<0.000000e+00> : vector<8xf32>
    %76 = vector.multi_reduction <add>, %75, %cst_29 [1] : vector<8x8xf32> to vector<8xf32>
    %77 = vector.shape_cast %76 : vector<8xf32> to vector<8x1xf32>
    %cst_30 = arith.constant 8.000000e+00 : f32
    %78 = vector.broadcast %cst_30 : f32 to vector<8x1xf32>
    %79 = arith.divf %77, %78 : vector<8x1xf32>
    %cst_31 = arith.constant 9.99999974E-6 : f32
    %80 = vector.broadcast %cst_31 : f32 to vector<8x1xf32>
    %81 = arith.addf %79, %80 : vector<8x1xf32>
    %82 = math.rsqrt %81 : vector<8x1xf32>
    %83 = vector.broadcast %82 : vector<8x1xf32> to vector<8x8xf32>
    %84 = arith.mulf %74, %83 : vector<8x8xf32>
    %85 = vector.broadcast %64 : vector<1x8xf32> to vector<8x8xf32>
    %86 = arith.mulf %84, %85 : vector<8x8xf32>
    %87 = vector.broadcast %65 : vector<1x8xf32> to vector<8x8xf32>
    %88 = arith.addf %86, %87 : vector<8x8xf32>
    %c0_32 = arith.constant 0 : index
    %c0_33 = arith.constant 0 : index
    %89 = vector.load %arg8[%c0_32, %c0_33] : memref<8x8xf32, #tpu.memory_space<vmem>>, vector<8x8xf32>
    tpu.vector_store %arg8[%c0_32, %c0_33], %88 {strides = array<i32>} : memref<8x8xf32, #tpu.memory_space<vmem>>, vector<8x8xf32>,
    return
  }
  func.func @transform_0(%arg0: i32) -> (i32, i32) {
    %c0_i32 = arith.constant 0 : i32
    %c0_i32_0 = arith.constant 0 : i32
    return %arg0, %c0_i32 : i32, i32
  }
  func.func @transform_1(%arg0: i32) -> (i32, i32) {
    %c0_i32 = arith.constant 0 : i32
    %c0_i32_0 = arith.constant 0 : i32
    %c0_i32_1 = arith.constant 0 : i32
    return %c0_i32, %c0_i32_0 : i32, i32
  }
  func.func @transform_2(%arg0: i32) -> (i32, i32) {
    %c0_i32 = arith.constant 0 : i32
    %c0_i32_0 = arith.constant 0 : i32
    %c0_i32_1 = arith.constant 0 : i32
    return %c0_i32, %c0_i32_0 : i32, i32
  }
  func.func @transform_3(%arg0: i32) -> (i32, i32) {
    %c0_i32 = arith.constant 0 : i32
    %c0_i32_0 = arith.constant 0 : i32
    %c0_i32_1 = arith.constant 0 : i32
    return %c0_i32, %c0_i32_0 : i32, i32
  }
  func.func @transform_4(%arg0: i32) -> (i32, i32) {
    %c0_i32 = arith.constant 0 : i32
    %c0_i32_0 = arith.constant 0 : i32
    %c0_i32_1 = arith.constant 0 : i32
    return %c0_i32, %c0_i32_0 : i32, i32
  }
  func.func @transform_5(%arg0: i32) -> (i32, i32) {
    %c0_i32 = arith.constant 0 : i32
    %c0_i32_0 = arith.constant 0 : i32
    %c0_i32_1 = arith.constant 0 : i32
    return %c0_i32, %c0_i32_0 : i32, i32
  }
  func.func @transform_6(%arg0: i32) -> (i32, i32) {
    %c0_i32 = arith.constant 0 : i32
    %c0_i32_0 = arith.constant 0 : i32
    %c0_i32_1 = arith.constant 0 : i32
    return %c0_i32, %c0_i32_0 : i32, i32
  }
  func.func @transform_7(%arg0: i32) -> (i32, i32) {
    %c0_i32 = arith.constant 0 : i32
    %c0_i32_0 = arith.constant 0 : i32
    return %arg0, %c0_i32 : i32, i32
  }
}

</mosaic_0001>

<llo_original>
// kernel: tpu_custom_call.1
$region0: #{tpu_custom_call.1}
  #allocation0 [shape = 'u32[]', space=smem, size = 0x4, offset = 0x4, fixed_abs, tag = 'smem constant byte address 0x4 - core index']
  #allocation1 [shape = 'u32[144,128]{1,0:T(1,128)}', space=vmem, size = 0x12000, scoped, tag = 'internal scratch']
  %s0 = inlined_call_operand.hbm [shape: f32[8,16], index: 0, kind: input, shape index: {}]
  %s1 = inlined_call_operand.vmem [shape: f32[16,32], index: 1, kind: input, shape index: {}]
  %s2 = inlined_call_operand.hbm [shape: f32[3,32], index: 2, kind: input, shape index: {}]
  %s3 = inlined_call_operand.vmem [shape: f32[32,32], index: 3, kind: input, shape index: {}]
  %s4 = inlined_call_operand.hbm [shape: f32[3,32], index: 4, kind: input, shape index: {}]
  %s5 = inlined_call_operand.vmem [shape: f32[32,8], index: 5, kind: input, shape index: {}]
  %s6 = inlined_call_operand.vmem [shape: f32[3,8], index: 6, kind: input, shape index: {}]
  %s7 = inlined_call_operand.hbm [shape: f32[8,8], index: 7, kind: output, shape index: {}]
  %s8 = sld [smem:[#allocation0]]
  $region50: #{tpu_custom_call.1} parent=0
    _
  %s10 = ssub.s32 1, %s8
  %s11 = scalar_select 0, %s10, %s8
  $region1: #{tpu_custom_call.1} parent=0
    #allocation2 [shape = 'u8[4096]{0}', space=vmem, size = 0x1000, scoped, tag = 'input window, operand 0, single buffered']
    #allocation3 [shape = 's32[1]{0}', space=sflag, size = 0x4, scoped, tag = 'scoped memory for tpu_custom_call.1']
    #allocation4 [shape = 's32[1]{0}', space=sflag, size = 0x4, scoped, tag = 'scoped memory for tpu_custom_call.1']
    #allocation5 [shape = 'u8[2048]{0}', space=vmem, size = 0x800, scoped, tag = 'input window, operand 2, single buffered']
    #allocation6 [shape = 's32[1]{0}', space=sflag, size = 0x4, scoped, tag = 'scoped memory for tpu_custom_call.1']
    #allocation7 [shape = 'u8[2048]{0}', space=vmem, size = 0x800, scoped, tag = 'input window, operand 4, single buffered']
    #allocation8 [shape = 'u8[4096]{0}', space=vmem, size = 0x1000, scoped, tag = 'output window, operand 0, single buffered']
    %12 = vsyncpa [#allocation3], 0
    %13 = vsyncpa [#allocation6], 0
    %14 = vsyncpa [#allocation4], 0
    // Predicated region
    $region2: #{tpu_custom_call.1} parent=1 // pred_check
      _
    $region3: #{tpu_custom_call.1} parent=1 // pred_check_branch
      %16 = sbr.rel (0) target = $region5
    $region4: #{tpu_custom_call.1} parent=1 // pred_region
      %s18 = ssub.s32 128, 128
      %19 = vsyncadd [#allocation3], %s18
      %s21 = sshll.u32 [#allocation2], 4
      %s22 = int_to_ptr.vmem [resolvable:$true] %s21
      %24 = dma.hbm_to_vmem [thread:$0]  %s0, 128, %s22, [#allocation3]
    $region5: #{tpu_custom_call.1} parent=1 // pred_fallthru
      _
    // Predicated region
    $region6: #{tpu_custom_call.1} parent=1 // pred_check
      _
    $region7: #{tpu_custom_call.1} parent=1 // pred_check_branch
      %26 = sbr.rel (0) target = $region9
    $region8: #{tpu_custom_call.1} parent=1 // pred_region
      _
    $region9: #{tpu_custom_call.1} parent=1 // pred_fallthru
      _
    // Predicated region
    $region10: #{tpu_custom_call.1} parent=1 // pred_check
      _
    $region11: #{tpu_custom_call.1} parent=1 // pred_check_branch
      %28 = sbr.rel (0) target = $region13
    $region12: #{tpu_custom_call.1} parent=1 // pred_region
      %s30 = ssub.s32 64, 64
      %31 = vsyncadd [#allocation6], %s30
      %s33 = sshll.u32 [#allocation5], 4
      %s34 = int_to_ptr.vmem [resolvable:$true] %s33
      %36 = dma.hbm_to_vmem [thread:$0]  %s2, 64, %s34, [#allocation6]
    $region13: #{tpu_custom_call.1} parent=1 // pred_fallthru
      _
    // Predicated region
    $region14: #{tpu_custom_call.1} parent=1 // pred_check
      _
    $region15: #{tpu_custom_call.1} parent=1 // pred_check_branch
      %38 = sbr.rel (0) target = $region17
    $region16: #{tpu_custom_call.1} parent=1 // pred_region
      _
    $region17: #{tpu_custom_call.1} parent=1 // pred_fallthru
      _
    // Predicated region
    $region18: #{tpu_custom_call.1} parent=1 // pred_check
      _
    $region19: #{tpu_custom_call.1} parent=1 // pred_check_branch
      %40 = sbr.rel (0) target = $region21
    $region20: #{tpu_custom_call.1} parent=1 // pred_region
      %s42 = ssub.s32 64, 64
      %43 = vsyncadd [#allocation6], %s42
      %s45 = sshll.u32 [#allocation7], 4
      %s46 = int_to_ptr.vmem [resolvable:$true] %s45
      %48 = dma.hbm_to_vmem [thread:$0]  %s4, 64, %s46, [#allocation6]
    $region21: #{tpu_custom_call.1} parent=1 // pred_fallthru
      _
    // Predicated region
    $region22: #{tpu_custom_call.1} parent=1 // pred_check
      _
    $region23: #{tpu_custom_call.1} parent=1 // pred_check_branch
      %50 = sbr.rel (0) target = $region25
    $region24: #{tpu_custom_call.1} parent=1 // pred_region
      _
    $region25: #{tpu_custom_call.1} parent=1 // pred_fallthru
      _
    // Predicated region
    $region26: #{tpu_custom_call.1} parent=1 // pred_check
      _
    $region27: #{tpu_custom_call.1} parent=1 // pred_check_branch
      %52 = sbr.rel (0) target = $region29
    $region28: #{tpu_custom_call.1} parent=1 // pred_region
      _
    $region29: #{tpu_custom_call.1} parent=1 // pred_fallthru
      _
    // Predicated region
    $region30: #{tpu_custom_call.1} parent=1 // pred_check
      _
    $region31: #{tpu_custom_call.1} parent=1 // pred_check_branch
      %54 = sbr.rel (0) target = $region33
    $region32: #{tpu_custom_call.1} parent=1 // pred_region
      %55 = dma.done [#allocation3], 128
    $region33: #{tpu_custom_call.1} parent=1 // pred_fallthru
      _
    // Predicated region
    $region34: #{tpu_custom_call.1} parent=1 // pred_check
      _
    $region35: #{tpu_custom_call.1} parent=1 // pred_check_branch
      %57 = sbr.rel (0) target = $region37
    $region36: #{tpu_custom_call.1} parent=1 // pred_region
      %58 = dma.done [#allocation6], 64
    $region37: #{tpu_custom_call.1} parent=1 // pred_fallthru
      _
    // Predicated region
    $region38: #{tpu_custom_call.1} parent=1 // pred_check
      _
    $region39: #{tpu_custom_call.1} parent=1 // pred_check_branch
      %60 = sbr.rel (0) target = $region41
    $region40: #{tpu_custom_call.1} parent=1 // pred_region
      %61 = dma.done [#allocation6], 64
    $region41: #{tpu_custom_call.1} parent=1 // pred_fallthru
      _
    %v62 = vld [vmem:[#allocation2] sm:$0xff]
    %v63 = vld [vmem:[%s1] sm:$0xff]
    %v64 = vld [vmem:[%s1 + $0x8] sm:$0xff]
    %v65 = vld [vmem:[#allocation5] sm:$0x7]
    %v66 = vlaneseq
    %v67 = vshrl.u32 %v66, 7
    %v68 = vsub.s32 0, %v67
    %v69 = vrot.slane %v65, %v68
    %vm70 = vcmask 130048
    %v72 = vsel %vm70, %v62, 0
    %74 = vmatprep.subr.mxu0 0.0
    %75 = vmatpush1.msra.mxu0 %v63
    %76 = vmatprep.subr.mxu0 0.0
    %77 = vmatpush1.msra.mxu0 %v64
    %78 = vmatprep.subr.mxu0 0.0
    %79 = vmatpush1.msra.mxu0 0.0
    %80 = vmatprep.subr.mxu0 0.0
    %81 = vmatpush1.msra.mxu0 0.0
    %82 = vmatprep.subr.mxu0 0.0
    %83 = vmatpush1.msra.mxu0 0.0
    %84 = vmatprep.subr.mxu0 0.0
    %85 = vmatpush1.msra.mxu0 0.0
    %86 = vmatprep.subr.mxu0 0.0
    %87 = vmatpush1.msra.mxu0 0.0
    %88 = vmatprep.subr.mxu0 0.0
    %89 = vmatpush1.msra.mxu0 0.0
    %90 = vmatprep.subr.mxu0 0.0
    %91 = vmatpush1.msra.mxu0 0.0
    %92 = vmatprep.subr.mxu0 0.0
    %93 = vmatpush1.msra.mxu0 0.0
    %94 = vmatprep.subr.mxu0 0.0
    %95 = vmatpush1.msra.mxu0 0.0
    %96 = vmatprep.subr.mxu0 0.0
    %97 = vmatpush1.msra.mxu0 0.0
    %98 = vmatprep.subr.mxu0 0.0
    %99 = vmatpush1.msra.mxu0 0.0
    %100 = vmatprep.subr.mxu0 0.0
    %101 = vmatpush1.msra.mxu0 0.0
    %102 = vmatprep.subr.mxu0 0.0
    %103 = vmatpush1.msra.mxu0 0.0
    %104 = vmatprep.subr.mxu0 0.0
    %105 = vmatpush1.msra.mxu0 0.0
    %106 = vmatprep.subr.mxu0 0.0
    %107 = vmatpush1.msra.mxu0 0.0
    %108 = vmatprep.subr.mxu0 0.0
    %109 = vmatpush1.msra.mxu0 0.0
    %110 = vmatprep.subr.mxu0 0.0
    %111 = vmatpush1.msra.mxu0 0.0
    %112 = vmatprep.subr.mxu0 0.0
    %113 = vmatpush1.msra.mxu0 0.0
    %114 = vmatprep.subr.mxu0 0.0
    %115 = vmatpush1.msra.mxu0 0.0
    %116 = vmatprep.subr.mxu0 0.0
    %117 = vmatpush1.msra.mxu0 0.0
    %118 = vmatprep.subr.mxu0 0.0
    %119 = vmatpush1.msra.mxu0 0.0
    %120 = vmatprep.subr.mxu0 0.0
    %121 = vmatpush1.msra.mxu0 0.0
    %122 = vmatprep.subr.mxu0 0.0
    %123 = vmatpush1.msra.mxu0 0.0
    %124 = vmatprep.subr.mxu0 0.0
    %125 = vmatpush1.msra.mxu0 0.0
    %126 = vmatprep.subr.mxu0 0.0
    %127 = vmatpush1.msra.mxu0 0.0
    %128 = vmatprep.subr.mxu0 0.0
    %129 = vmatpush1.msra.mxu0 0.0
    %130 = vmatprep.subr.mxu0 0.0
    %131 = vmatpush1.msra.mxu0 0.0
    %132 = vmatprep.subr.mxu0 0.0
    %133 = vmatpush1.msra.mxu0 0.0
    %134 = vmatprep.subr.mxu0 0.0
    %135 = vmatpush1.msra.mxu0 0.0
    %136 = vmatprep.subr.mxu0 0.0
    %137 = vmatpush1.msra.mxu0 0.0
    %138 = vmatprep.mubr.f32.mxu0 0.0
    %139 = vmatmul.mubr.f32.gmra.mrb[0].mxu0 %v72
    %v140 = vpop.f32.mrb[0].mxu0
    %v141 = vadd.f32 %v69, %v140
    %v142 = vpop.f32.mrb[0].mxu0
    %143 = vdwg.mxu0
    %vm144 = vcmask 261120
    %v145 = vsel %vm144, %v141, 0.0
    %146 = vadd.xlane.f32.xlu0 %v145
    %v147 = vpop.xlane.xlu0 %146
    %v148 = vrcp.pop 32.0
    %v149 = vmul.f32 %v147, %v148
    %v150 = vsub.f32 %v141, %v149
    %v151 = vmul.f32 %v150, %v150
    %v152 = vsel %vm144, %v151, 0.0
    %153 = vadd.xlane.f32.xlu0 %v152
    %v154 = vpop.xlane.xlu0 %153
    %v155 = vmul.f32 %v154, %v148
    %v156 = vadd.f32 %v155, 1e-05
    %v157 = vrsqrt.pop %v156
    %v158 = vmul.f32 %v150, %v157
    %v159 = vlaneseq
    %v160 = vshrl.u32 %v159, 7
    %v161 = vsub.s32 1, %v160
    %v162 = vrot.slane %v65, %v161
    %v163 = vmul.f32 %v158, %v162
    %v164 = vlaneseq
    %v165 = vshrl.u32 %v164, 7
    %v166 = vsub.s32 2, %v165
    %v167 = vrot.slane %v65, %v166
    %v168 = vadd.f32 %v163, %v167
    %v169 = vmax.f32 %v168, 0.0
    %v170 = vld [vmem:[%s3] sm:$0xff]
    %v171 = vld [vmem:[%s3 + $0x8] sm:$0xff]
    %v172 = vld [vmem:[%s3 + $0x10] sm:$0xff]
    %v173 = vld [vmem:[%s3 + $0x18] sm:$0xff]
    %v174 = vld [vmem:[#allocation7] sm:$0x7]
    %v175 = vlaneseq
    %v176 = vshrl.u32 %v175, 7
    %v177 = vsub.s32 0, %v176
    %v178 = vrot.slane %v174, %v177
    %v180 = vsel %vm144, %v169, 0
    %182 = vmatprep.subr.mxu0 0.0
    %183 = vmatpush1.msra.mxu0 %v170
    %184 = vmatprep.subr.mxu0 0.0
    %185 = vmatpush1.msra.mxu0 %v171
    %186 = vmatprep.subr.mxu0 0.0
    %187 = vmatpush1.msra.mxu0 %v172
    %188 = vmatprep.subr.mxu0 0.0
    %189 = vmatpush1.msra.mxu0 %v173
    %190 = vmatprep.subr.mxu0 0.0
    %191 = vmatpush1.msra.mxu0 0.0
    %192 = vmatprep.subr.mxu0 0.0
    %193 = vmatpush1.msra.mxu0 0.0
    %194 = vmatprep.subr.mxu0 0.0
    %195 = vmatpush1.msra.mxu0 0.0
    %196 = vmatprep.subr.mxu0 0.0
    %197 = vmatpush1.msra.mxu0 0.0
    %198 = vmatprep.subr.mxu0 0.0
    %199 = vmatpush1.msra.mxu0 0.0
    %200 = vmatprep.subr.mxu0 0.0
    %201 = vmatpush1.msra.mxu0 0.0
    %202 = vmatprep.subr.mxu0 0.0
    %203 = vmatpush1.msra.mxu0 0.0
    %204 = vmatprep.subr.mxu0 0.0
    %205 = vmatpush1.msra.mxu0 0.0
    %206 = vmatprep.subr.mxu0 0.0
    %207 = vmatpush1.msra.mxu0 0.0
    %208 = vmatprep.subr.mxu0 0.0
    %209 = vmatpush1.msra.mxu0 0.0
    %210 = vmatprep.subr.mxu0 0.0
    %211 = vmatpush1.msra.mxu0 0.0
    %212 = vmatprep.subr.mxu0 0.0
    %213 = vmatpush1.msra.mxu0 0.0
    %214 = vmatprep.subr.mxu0 0.0
    %215 = vmatpush1.msra.mxu0 0.0
    %216 = vmatprep.subr.mxu0 0.0
    %217 = vmatpush1.msra.mxu0 0.0
    %218 = vmatprep.subr.mxu0 0.0
    %219 = vmatpush1.msra.mxu0 0.0
    %220 = vmatprep.subr.mxu0 0.0
    %221 = vmatpush1.msra.mxu0 0.0
    %222 = vmatprep.subr.mxu0 0.0
    %223 = vmatpush1.msra.mxu0 0.0
    %224 = vmatprep.subr.mxu0 0.0
    %225 = vmatpush1.msra.mxu0 0.0
    %226 = vmatprep.subr.mxu0 0.0
    %227 = vmatpush1.msra.mxu0 0.0
    %228 = vmatprep.subr.mxu0 0.0
    %229 = vmatpush1.msra.mxu0 0.0
    %230 = vmatprep.subr.mxu0 0.0
    %231 = vmatpush1.msra.mxu0 0.0
    %232 = vmatprep.subr.mxu0 0.0
    %233 = vmatpush1.msra.mxu0 0.0
    %234 = vmatprep.subr.mxu0 0.0
    %235 = vmatpush1.msra.mxu0 0.0
    %236 = vmatprep.subr.mxu0 0.0
    %237 = vmatpush1.msra.mxu0 0.0
    %238 = vmatprep.subr.mxu0 0.0
    %239 = vmatpush1.msra.mxu0 0.0
    %240 = vmatprep.subr.mxu0 0.0
    %241 = vmatpush1.msra.mxu0 0.0
    %242 = vmatprep.subr.mxu0 0.0
    %243 = vmatpush1.msra.mxu0 0.0
    %244 = vmatprep.subr.mxu0 0.0
    %245 = vmatpush1.msra.mxu0 0.0
    %246 = vmatprep.mubr.f32.mxu0 0.0
    %247 = vmatmul.mubr.f32.gmra.mrb[0].mxu0 %v180
    %v248 = vpop.f32.mrb[0].mxu0
    %v249 = vadd.f32 %v178, %v248
    %v250 = vpop.f32.mrb[0].mxu0
    %251 = vdwg.mxu0
    %v252 = vsel %vm144, %v249, 0.0
    %253 = vadd.xlane.f32.xlu0 %v252
    %v254 = vpop.xlane.xlu0 %253
    %v255 = vmul.f32 %v254, %v148
    %v256 = vsub.f32 %v249, %v255
    %v257 = vmul.f32 %v256, %v256
    %v258 = vsel %vm144, %v257, 0.0
    %259 = vadd.xlane.f32.xlu0 %v258
    %v260 = vpop.xlane.xlu0 %259
    %v261 = vmul.f32 %v260, %v148
    %v262 = vadd.f32 %v261, 1e-05
    %v263 = vrsqrt.pop %v262
    %v264 = vmul.f32 %v256, %v263
    %v265 = vlaneseq
    %v266 = vshrl.u32 %v265, 7
    %v267 = vsub.s32 1, %v266
    %v268 = vrot.slane %v174, %v267
    %v269 = vmul.f32 %v264, %v268
    %v270 = vlaneseq
    %v271 = vshrl.u32 %v270, 7
    %v272 = vsub.s32 2, %v271
    %v273 = vrot.slane %v174, %v272
    %v274 = vadd.f32 %v269, %v273
    %v275 = vmax.f32 %v274, 0.0
    %v276 = vld [vmem:[%s5] sm:$0xff]
    %v277 = vld [vmem:[%s5 + $0x8] sm:$0xff]
    %v278 = vld [vmem:[%s5 + $0x10] sm:$0xff]
    %v279 = vld [vmem:[%s5 + $0x18] sm:$0xff]
    %v280 = vld [vmem:[%s6] sm:$0x7]
    %v281 = vlaneseq
    %v282 = vshrl.u32 %v281, 7
    %v283 = vsub.s32 0, %v282
    %v284 = vrot.slane %v280, %v283
    %v286 = vsel %vm144, %v275, 0
    %288 = vmatprep.subr.mxu0 0.0
    %289 = vmatpush1.msra.mxu0 %v276
    %290 = vmatprep.subr.mxu0 0.0
    %291 = vmatpush1.msra.mxu0 %v277
    %292 = vmatprep.subr.mxu0 0.0
    %293 = vmatpush1.msra.mxu0 %v278
    %294 = vmatprep.subr.mxu0 0.0
    %295 = vmatpush1.msra.mxu0 %v279
    %296 = vmatprep.subr.mxu0 0.0
    %297 = vmatpush1.msra.mxu0 0.0
    %298 = vmatprep.subr.mxu0 0.0
    %299 = vmatpush1.msra.mxu0 0.0
    %300 = vmatprep.subr.mxu0 0.0
    %301 = vmatpush1.msra.mxu0 0.0
    %302 = vmatprep.subr.mxu0 0.0
    %303 = vmatpush1.msra.mxu0 0.0
    %304 = vmatprep.subr.mxu0 0.0
    %305 = vmatpush1.msra.mxu0 0.0
    %306 = vmatprep.subr.mxu0 0.0
    %307 = vmatpush1.msra.mxu0 0.0
    %308 = vmatprep.subr.mxu0 0.0
    %309 = vmatpush1.msra.mxu0 0.0
    %310 = vmatprep.subr.mxu0 0.0
    %311 = vmatpush1.msra.mxu0 0.0
    %312 = vmatprep.subr.mxu0 0.0
    %313 = vmatpush1.msra.mxu0 0.0
    %314 = vmatprep.subr.mxu0 0.0
    %315 = vmatpush1.msra.mxu0 0.0
    %316 = vmatprep.subr.mxu0 0.0
    %317 = vmatpush1.msra.mxu0 0.0
    %318 = vmatprep.subr.mxu0 0.0
    %319 = vmatpush1.msra.mxu0 0.0
    %320 = vmatprep.subr.mxu0 0.0
    %321 = vmatpush1.msra.mxu0 0.0
    %322 = vmatprep.subr.mxu0 0.0
    %323 = vmatpush1.msra.mxu0 0.0
    %324 = vmatprep.subr.mxu0 0.0
    %325 = vmatpush1.msra.mxu0 0.0
    %326 = vmatprep.subr.mxu0 0.0
    %327 = vmatpush1.msra.mxu0 0.0
    %328 = vmatprep.subr.mxu0 0.0
    %329 = vmatpush1.msra.mxu0 0.0
    %330 = vmatprep.subr.mxu0 0.0
    %331 = vmatpush1.msra.mxu0 0.0
    %332 = vmatprep.subr.mxu0 0.0
    %333 = vmatpush1.msra.mxu0 0.0
    %334 = vmatprep.subr.mxu0 0.0
    %335 = vmatpush1.msra.mxu0 0.0
    %336 = vmatprep.subr.mxu0 0.0
    %337 = vmatpush1.msra.mxu0 0.0
    %338 = vmatprep.subr.mxu0 0.0
    %339 = vmatpush1.msra.mxu0 0.0
    %340 = vmatprep.subr.mxu0 0.0
    %341 = vmatpush1.msra.mxu0 0.0
    %342 = vmatprep.subr.mxu0 0.0
    %343 = vmatpush1.msra.mxu0 0.0
    %344 = vmatprep.subr.mxu0 0.0
    %345 = vmatpush1.msra.mxu0 0.0
    %346 = vmatprep.subr.mxu0 0.0
    %347 = vmatpush1.msra.mxu0 0.0
    %348 = vmatprep.subr.mxu0 0.0
    %349 = vmatpush1.msra.mxu0 0.0
    %350 = vmatprep.subr.mxu0 0.0
    %351 = vmatpush1.msra.mxu0 0.0
    %352 = vmatprep.mubr.f32.mxu0 0.0
    %353 = vmatmul.mubr.f32.gmra.mrb[0].mxu0 %v286
    %v354 = vpop.f32.mrb[0].mxu0
    %v355 = vadd.f32 %v284, %v354
    %v356 = vpop.f32.mrb[0].mxu0
    %357 = vdwg.mxu0
    %vm358 = vcmask 64512
    %v359 = vsel %vm358, %v355, 0.0
    %360 = vadd.xlane.f32.xlu0 %v359
    %v361 = vpop.xlane.xlu0 %360
    %v362 = vrcp.pop 8.0
    %v363 = vmul.f32 %v361, %v362
    %v364 = vsub.f32 %v355, %v363
    %v365 = vmul.f32 %v364, %v364
    %v366 = vsel %vm358, %v365, 0.0
    %367 = vadd.xlane.f32.xlu0 %v366
    %v368 = vpop.xlane.xlu0 %367
    %v369 = vmul.f32 %v368, %v362
    %v370 = vadd.f32 %v369, 1e-05
    %v371 = vrsqrt.pop %v370
    %v372 = vmul.f32 %v364, %v371
    %v373 = vlaneseq
    %v374 = vshrl.u32 %v373, 7
    %v375 = vsub.s32 1, %v374
    %v376 = vrot.slane %v280, %v375
    %v377 = vmul.f32 %v372, %v376
    %v378 = vlaneseq
    %v379 = vshrl.u32 %v378, 7
    %v380 = vsub.s32 2, %v379
    %v381 = vrot.slane %v280, %v380
    %v382 = vadd.f32 %v377, %v381
    %383 = vst.msk [vmem:[#allocation8] sm:$0xff] %vm358, %v382
    // Predicated region
    $region42: #{tpu_custom_call.1} parent=1 // pred_check
      _
    $region43: #{tpu_custom_call.1} parent=1 // pred_check_branch
      %385 = sbr.rel (0) target = $region45
    $region44: #{tpu_custom_call.1} parent=1 // pred_region
      %s387 = ssub.s32 128, 128
      %388 = vsyncadd [#allocation4], %s387
      %s390 = sshll.u32 [#allocation8], 4
      %s391 = int_to_ptr.vmem [resolvable:$true] %s390
      %393 = dma.vmem_to_hbm [thread:$0]  %s391, 128, %s7, [#allocation4]
    $region45: #{tpu_custom_call.1} parent=1 // pred_fallthru
      _
    // Predicated region
    $region46: #{tpu_custom_call.1} parent=1 // pred_check
      _
    $region47: #{tpu_custom_call.1} parent=1 // pred_check_branch
      %395 = sbr.rel (0) target = $region49
    $region48: #{tpu_custom_call.1} parent=1 // pred_region
      %396 = dma.done [#allocation4], 128
    $region49: #{tpu_custom_call.1} parent=1 // pred_fallthru
      _
    %397 = vsyncpa [#allocation3], 1
    %398 = vsyncpa [#allocation6], 1
    %399 = vsyncpa [#allocation4], 1

</llo_original>
